<compile_context>
chip_gen: v7x
topology: tpu7x:2x2x1
jax: 0.10.0
libtpu: 0.0.40
codegen_flags: <defaults>
</compile_context>

<pallas_src>
import functools
import math

import jax
import jax.numpy as jnp
from jax.experimental import pallas as pl
from jax.experimental.pallas import tpu as pltpu

IN_SIZE = 768  # fixed by the module (ProjAdapter(768, hidden))


def _adapter_kernel(sel_ref, x_ref, w0_ref, b0_ref, w1_ref, b1_ref, o_ref):
    """One ProjAdapter tile: o = W1(gelu(W0 x + b0)) + b1 + x (exact erf GELU)."""
    del sel_ref  # only used by the index_maps

    x = x_ref[...]                         # storage dtype (bf16 or f32)
    xf = x.astype(jnp.float32)             # f32 copy for the residual

    # Down-projection: [tm, 768] @ [768, H] -> [tm, H], f32 accumulation.
    h = jnp.dot(x, w0_ref[...], preferred_element_type=jnp.float32)
    h = h + b0_ref[...].astype(jnp.float32)

    # Exact GELU (matches torch.nn.GELU() default, approximate='none'), in f32.
    h = 0.5 * h * (1.0 + jax.lax.erf(h * 0.7071067811865476))

    # Up-projection: [tm, H] @ [H, 768] -> [tm, 768], f32 accumulation.
    # Cast the activation to the weight storage dtype so bf16 weights get a
    # native single-pass MXU matmul.
    y = jnp.dot(h.astype(w1_ref.dtype), w1_ref[...],
                preferred_element_type=jnp.float32)
    y = y + b1_ref[...].astype(jnp.float32)

    # Residual connection, write in the output dtype.
    o_ref[...] = (y + xf).astype(o_ref.dtype)


def _choose_tm(m, tm_max=512, min_steps=4):
    """Pick a row tile: big (HBM-bound kernel) but >= min_steps grid iterations
    (keeps both v7x TensorCores busy); always a multiple of 8 (f32 sublane)."""
    tm = max(8, min(tm_max, -(-m // min_steps)))
    tm = -(-tm // 8) * 8
    return tm


@functools.partial(jax.jit, static_argnames=("tm",))
def proj_adapter_stack_pallas(sel, x2d, w0s, b0s, w1s, b1s, *, tm=512):
    """Apply the adapter selected by `sel` (int32 [1]) to x2d [M, 768].

    w0s: [N, 768, H], b0s: [N, 1, H], w1s: [N, H, 768], b1s: [N, 1, 768]
    (N = 2 * num_layers: slf layers first, then ffn layers).
    """
    m, d = x2d.shape
    h = w0s.shape[-1]
    assert d == IN_SIZE

    # Pad rows to a multiple of tm so every tile is full / lane-dense.
    pad = (-m) % tm
    x_p = jnp.pad(x2d, ((0, pad), (0, 0))) if pad else x2d
    mp = m + pad
    grid = (mp // tm,)

    out = pl.pallas_call(
        _adapter_kernel,
        out_shape=jax.ShapeDtypeStruct((mp, d), x2d.dtype),
        grid_spec=pltpu.PrefetchScalarGridSpec(
            num_scalar_prefetch=1,          # `sel` lands in SMEM, feeds index_maps
            grid=grid,
            in_specs=[
                # activations: one [tm, 768] tile per grid step
                pl.BlockSpec((tm, d), lambda i, sel_ref: (i, 0)),
                # weights/biases: one layer's slab, constant across the grid
                pl.BlockSpec((None, d, h), lambda i, sel_ref: (sel_ref[0], 0, 0)),
                pl.BlockSpec((None, 1, h), lambda i, sel_ref: (sel_ref[0], 0, 0)),
                pl.BlockSpec((None, h, d), lambda i, sel_ref: (sel_ref[0], 0, 0)),
                pl.BlockSpec((None, 1, d), lambda i, sel_ref: (sel_ref[0], 0, 0)),
            ],
            out_specs=pl.BlockSpec((tm, d), lambda i, sel_ref: (i, 0)),
        ),
        compiler_params=pltpu.CompilerParams(
            dimension_semantics=("parallel",)),
    )(sel, x_p, w0s, b0s, w1s, b1s)

    return out[:m] if pad else out


class AdapterStackPallas:
    """JAX/Pallas port of AdapterStack.

    Both 'slf' and 'ffn' adapter banks are stored stacked as [2*L, ...]; a
    single compiled kernel serves every (layer_id, name) via scalar prefetch.
    """

    def __init__(self, adapter_hidden_size, num_hidden_layers=12, key=None,
                 param_dtype=jnp.bfloat16):
        if key is None:
            key = jax.random.PRNGKey(0)
        self.hidden = int(adapter_hidden_size)
        self.num_layers = int(num_hidden_layers)
        self.param_dtype = param_dtype

        d, h, L = IN_SIZE, self.hidden, self.num_layers
        # nn.Linear default init: U(-1/sqrt(fan_in), 1/sqrt(fan_in)).
        lim0 = 1.0 / math.sqrt(d)
        lim1 = 1.0 / math.sqrt(h)

        w0s, b0s, w1s, b1s = [], [], [], []
        for name_idx in range(2):          # 0 = 'slf', 1 = 'ffn' (deterministic)
            for layer in range(L):
                k = jax.random.fold_in(jax.random.fold_in(key, name_idx), layer)
                k0, k1, k2, k3 = jax.random.split(k, 4)
                # Weights stored pre-transposed as [in, out] so the kernel does x @ W.
                w0s.append(jax.random.uniform(k0, (d, h), jnp.float32, -lim0, lim0))
                b0s.append(jax.random.uniform(k1, (1, h), jnp.float32, -lim0, lim0))
                w1s.append(jax.random.uniform(k2, (h, d), jnp.float32, -lim1, lim1))
                b1s.append(jax.random.uniform(k3, (1, d), jnp.float32, -lim1, lim1))

        self.w0s = jnp.stack(w0s).astype(param_dtype)   # [2L, 768, H]
        self.b0s = jnp.stack(b0s).astype(param_dtype)   # [2L, 1,   H]
        self.w1s = jnp.stack(w1s).astype(param_dtype)   # [2L, H, 768]
        self.b1s = jnp.stack(b1s).astype(param_dtype)   # [2L, 1, 768]

    def selected_params(self, layer_id, name):
        idx = (0 if name == "slf" else self.num_layers) + layer_id
        return (self.w0s[idx], self.b0s[idx], self.w1s[idx], self.b1s[idx])

    def __call__(self, inputs, layer_id, name):
        assert name in ("slf", "ffn")
        sel = jnp.asarray(
            [(0 if name == "slf" else self.num_layers) + layer_id], jnp.int32)

        orig_shape = inputs.shape
        x2d = inputs.reshape(-1, orig_shape[-1])          # [tokens, 768]
        tm = _choose_tm(x2d.shape[0])
        out = proj_adapter_stack_pallas(sel, x2d, self.w0s, self.b0s,
                                        self.w1s, self.b1s, tm=tm)
        return out.reshape(orig_shape)


def _reference(x2d, w0, b0, w1, b1):
    """Plain-JAX f32 reference of the same math (exact GELU + residual)."""
    xf = x2d.astype(jnp.float32)
    h = jax.nn.gelu(xf @ w0.astype(jnp.float32) + b0.astype(jnp.float32),
                    approximate=False)
    y = h @ w1.astype(jnp.float32) + b1.astype(jnp.float32)
    return y + xf


if __name__ == "__main__":
    key = jax.random.PRNGKey(0)
    batch, seq, hidden_adapter, num_layers = 2, 8, 32, 12

    # ---- Test 1: bf16 storage (recommended fast path), 'slf' branch --------
    stack_bf16 = AdapterStackPallas(hidden_adapter, num_layers, key=key,
                                    param_dtype=jnp.bfloat16)
    x = jax.random.normal(jax.random.fold_in(key, 123),
                          (batch, seq, IN_SIZE), jnp.float32)
    x_bf16 = x.astype(jnp.bfloat16)

    layer_id, name = 3, "slf"
    out = jax.block_until_ready(stack_bf16(x_bf16, layer_id, name))
    assert out.shape == x_bf16.shape and out.dtype == x_bf16.dtype

    w0, b0, w1, b1 = stack_bf16.selected_params(layer_id, name)
    ref = _reference(x_bf16.reshape(-1, IN_SIZE), w0, b0, w1, b1).reshape(x.shape)
    assert jnp.allclose(out.astype(jnp.float32), ref, atol=5e-2, rtol=5e-2)

    # 'ffn' branch on a different layer (same compiled kernel, new scalar).
    out2 = jax.block_until_ready(stack_bf16(x_bf16, 7, "ffn"))
    assert out2.shape == x_bf16.shape

    # ---- Test 2: f32 storage, exact-match check vs f32 reference -----------
    stack_f32 = AdapterStackPallas(hidden_adapter, num_layers, key=key,
                                   param_dtype=jnp.float32)
    out3 = jax.block_until_ready(stack_f32(x, 5, "ffn"))
    w0, b0, w1, b1 = stack_f32.selected_params(5, "ffn")
    ref3 = _reference(x.reshape(-1, IN_SIZE), w0, b0, w1, b1).reshape(x.shape)
    assert out3.shape == x.shape and out3.dtype == x.dtype
    assert jnp.allclose(out3, ref3, atol=2e-4, rtol=2e-4)

    # ---- Test 3: non-multiple-of-tile token count (exercises the pad path) -
    x_odd = jax.random.normal(jax.random.fold_in(key, 7),
                              (batch, 7, IN_SIZE), jnp.float32)
    out4 = jax.block_until_ready(stack_f32(x_odd, 0, "slf"))
    w0, b0, w1, b1 = stack_f32.selected_params(0, "slf")
    ref4 = _reference(x_odd.reshape(-1, IN_SIZE), w0, b0, w1, b1).reshape(x_odd.shape)
    assert jnp.allclose(out4, ref4, atol=2e-4, rtol=2e-4)

    print("KERNEL_OK")
</pallas_src>

<mosaic_0001>
module attributes {stable_mosaic.version = 11 : i64} {
  func.func @_adapter_kernel(%arg0: i32, %arg1: memref<1xi32, #tpu.memory_space<smem>>, %arg2: memref<8x768xbf16, #tpu.memory_space<vmem>>, %arg3: memref<1x768x32xbf16, #tpu.memory_space<vmem>>, %arg4: memref<1x1x32xbf16, #tpu.memory_space<vmem>>, %arg5: memref<1x32x768xbf16, #tpu.memory_space<vmem>>, %arg6: memref<1x1x768xbf16, #tpu.memory_space<vmem>>, %arg7: memref<8x768xbf16, #tpu.memory_space<vmem>>) attributes {dimension_semantics = [#tpu.dimension_semantics<parallel>], iteration_bounds = array<i64: 2>, scalar_prefetch = 1 : i64, scratch_operands = 0 : i64, tpu.core_type = #tpu.core_type<tc>, window_params = [{transform_indices = @transform_0, window_bounds = array<i64: 8, 768>}, {transform_indices = @transform_1, window_bounds = array<i64: 1, 768, 32>}, {transform_indices = @transform_2, window_bounds = array<i64: 1, 1, 32>}, {transform_indices = @transform_3, window_bounds = array<i64: 1, 32, 768>}, {transform_indices = @transform_4, window_bounds = array<i64: 1, 1, 768>}, {transform_indices = @transform_5, window_bounds = array<i64: 8, 768>}]} {
    %c0 = arith.constant 0 : index
    %c0_0 = arith.constant 0 : index
    %0 = vector.load %arg2[%c0, %c0_0] : memref<8x768xbf16, #tpu.memory_space<vmem>>, vector<8x768xbf16>
    %1 = arith.extf %0 : vector<8x768xbf16> to vector<8x768xf32>
    %c0_1 = arith.constant 0 : index
    %c0_2 = arith.constant 0 : index
    %c0_3 = arith.constant 0 : index
    %2 = vector.load %arg3[%c0_1, %c0_2, %c0_3] : memref<1x768x32xbf16, #tpu.memory_space<vmem>>, vector<1x768x32xbf16>
    %3 = vector.shape_cast %2 : vector<1x768x32xbf16> to vector<768x32xbf16>
    %cst = arith.constant dense<0.000000e+00> : vector<8x32xf32>
    %4 = tpu.matmul %0, %3, %cst {dimension_numbers = #tpu.dot_dimension_numbers<[1], [0], [0], [1], [0, 0, 1, 1], [], []>} : vector<8x768xbf16>, vector<768x32xbf16>, vector<8x32xf32> -> vector<8x32xf32>
    %c0_4 = arith.constant 0 : index
    %c0_5 = arith.constant 0 : index
    %c0_6 = arith.constant 0 : index
    %5 = vector.load %arg4[%c0_4, %c0_5, %c0_6] : memref<1x1x32xbf16, #tpu.memory_space<vmem>>, vector<1x1x32xbf16>
    %6 = vector.shape_cast %5 : vector<1x1x32xbf16> to vector<1x32xbf16>
    %7 = arith.extf %6 : vector<1x32xbf16> to vector<1x32xf32>
    %8 = vector.broadcast %7 : vector<1x32xf32> to vector<8x32xf32>
    %9 = arith.addf %4, %8 : vector<8x32xf32>
    %cst_7 = arith.constant 5.000000e-01 : f32
    %10 = vector.broadcast %cst_7 : f32 to vector<8x32xf32>
    %11 = arith.mulf %10, %9 : vector<8x32xf32>
    %cst_8 = arith.constant 0.707106769 : f32
    %12 = vector.broadcast %cst_8 : f32 to vector<8x32xf32>
    %13 = arith.mulf %9, %12 : vector<8x32xf32>
    %14 = math.erf %13 : vector<8x32xf32>
    %cst_9 = arith.constant 1.000000e+00 : f32
    %15 = vector.broadcast %cst_9 : f32 to vector<8x32xf32>
    %16 = arith.addf %15, %14 : vector<8x32xf32>
    %17 = arith.mulf %11, %16 : vector<8x32xf32>
    %18 = arith.truncf %17 : vector<8x32xf32> to vector<8x32xbf16>
    %c0_10 = arith.constant 0 : index
    %c0_11 = arith.constant 0 : index
    %c0_12 = arith.constant 0 : index
    %19 = vector.load %arg5[%c0_10, %c0_11, %c0_12] : memref<1x32x768xbf16, #tpu.memory_space<vmem>>, vector<1x32x768xbf16>
    %20 = vector.shape_cast %19 : vector<1x32x768xbf16> to vector<32x768xbf16>
    %cst_13 = arith.constant dense<0.000000e+00> : vector<8x768xf32>
    %21 = tpu.matmul %18, %20, %cst_13 {dimension_numbers = #tpu.dot_dimension_numbers<[1], [0], [0], [1], [0, 0, 1, 1], [], []>} : vector<8x32xbf16>, vector<32x768xbf16>, vector<8x768xf32> -> vector<8x768xf32>
    %c0_14 = arith.constant 0 : index
    %c0_15 = arith.constant 0 : index
    %c0_16 = arith.constant 0 : index
    %22 = vector.load %arg6[%c0_14, %c0_15, %c0_16] : memref<1x1x768xbf16, #tpu.memory_space<vmem>>, vector<1x1x768xbf16>
    %23 = vector.shape_cast %22 : vector<1x1x768xbf16> to vector<1x768xbf16>
    %24 = arith.extf %23 : vector<1x768xbf16> to vector<1x768xf32>
    %25 = vector.broadcast %24 : vector<1x768xf32> to vector<8x768xf32>
    %26 = arith.addf %21, %25 : vector<8x768xf32>
    %27 = arith.addf %26, %1 : vector<8x768xf32>
    %28 = arith.truncf %27 : vector<8x768xf32> to vector<8x768xbf16>
    %c0_17 = arith.constant 0 : index
    %c0_18 = arith.constant 0 : index
    %29 = vector.load %arg7[%c0_17, %c0_18] : memref<8x768xbf16, #tpu.memory_space<vmem>>, vector<8x768xbf16>
    tpu.vector_store %arg7[%c0_17, %c0_18], %28 {strides = array<i32>} : memref<8x768xbf16, #tpu.memory_space<vmem>>, vector<8x768xbf16>,
    return
  }
  func.func @transform_0(%arg0: i32, %arg1: memref<1xi32, #tpu.memory_space<smem>>) -> (i32, i32) {
    %c0_i32 = arith.constant 0 : i32
    %c0_i32_0 = arith.constant 0 : i32
    return %arg0, %c0_i32 : i32, i32
  }
  func.func @transform_1(%arg0: i32, %arg1: memref<1xi32, #tpu.memory_space<smem>>) -> (i32, i32, i32) {
    %c0 = arith.constant 0 : index
    %0 = memref.load %arg1[%c0] : memref<1xi32, #tpu.memory_space<smem>>
    %c0_i32 = arith.constant 0 : i32
    %c0_i32_0 = arith.constant 0 : i32
    %c0_i32_1 = arith.constant 0 : i32
    return %0, %c0_i32, %c0_i32_0 : i32, i32, i32
  }
  func.func @transform_2(%arg0: i32, %arg1: memref<1xi32, #tpu.memory_space<smem>>) -> (i32, i32, i32) {
    %c0 = arith.constant 0 : index
    %0 = memref.load %arg1[%c0] : memref<1xi32, #tpu.memory_space<smem>>
    %c0_i32 = arith.constant 0 : i32
    %c0_i32_0 = arith.constant 0 : i32
    %c0_i32_1 = arith.constant 0 : i32
    return %0, %c0_i32, %c0_i32_0 : i32, i32, i32
  }
  func.func @transform_3(%arg0: i32, %arg1: memref<1xi32, #tpu.memory_space<smem>>) -> (i32, i32, i32) {
    %c0 = arith.constant 0 : index
    %0 = memref.load %arg1[%c0] : memref<1xi32, #tpu.memory_space<smem>>
    %c0_i32 = arith.constant 0 : i32
    %c0_i32_0 = arith.constant 0 : i32
    %c0_i32_1 = arith.constant 0 : i32
    return %0, %c0_i32, %c0_i32_0 : i32, i32, i32
  }
  func.func @transform_4(%arg0: i32, %arg1: memref<1xi32, #tpu.memory_space<smem>>) -> (i32, i32, i32) {
    %c0 = arith.constant 0 : index
    %0 = memref.load %arg1[%c0] : memref<1xi32, #tpu.memory_space<smem>>
    %c0_i32 = arith.constant 0 : i32
    %c0_i32_0 = arith.constant 0 : i32
    %c0_i32_1 = arith.constant 0 : i32
    return %0, %c0_i32, %c0_i32_0 : i32, i32, i32
  }
  func.func @transform_5(%arg0: i32, %arg1: memref<1xi32, #tpu.memory_space<smem>>) -> (i32, i32) {
    %c0_i32 = arith.constant 0 : i32
    %c0_i32_0 = arith.constant 0 : i32
    return %arg0, %c0_i32 : i32, i32
  }
}

</mosaic_0001>

<llo_original>
// kernel: proj_adapter_stack_pallas.1
$region0: #{proj_adapter_stack_pallas.1}
  #allocation0 [shape = 'u32[]', space=smem, size = 0x4, offset = 0x4, fixed_abs, tag = 'smem constant byte address 0x4 - core index']
  #allocation1 [shape = 'u32[144,128]{1,0:T(1,128)}', space=vmem, size = 0x12000, scoped, tag = 'internal scratch']
  #allocation2 [shape = 's32[1]{0}', space=sflag, size = 0x4, scoped, tag = 'scoped memory for proj_adapter_stack_pallas.1']
  #allocation3 [shape = 's32[1]{0:T(128)S(6)}', space=smem, size = 0x200, scoped, tag = 'prefetched SMEM operand 0']
  %s0 = inlined_call_operand.<no memory space> [shape: s32[1], index: 0, kind: input, shape index: {}]
  %s1 = inlined_call_operand.vmem [shape: bf16[16,768], index: 1, kind: input, shape index: {}]
  %s2 = inlined_call_operand.vmem [shape: bf16[24,768,32], index: 2, kind: input, shape index: {}]
  %s3 = inlined_call_operand.vmem [shape: bf16[24,1,32], index: 3, kind: input, shape index: {}]
  %s4 = inlined_call_operand.vmem [shape: bf16[24,32,768], index: 4, kind: input, shape index: {}]
  %s5 = inlined_call_operand.vmem [shape: bf16[24,1,768], index: 5, kind: input, shape index: {}]
  %s6 = inlined_call_operand.hbm [shape: bf16[16,768], index: 6, kind: output, shape index: {}]
  %s7 = sld [smem:[#allocation0]]
  $region53: #{proj_adapter_stack_pallas.1} parent=0
    _
  %s9 = ssub.s32 1, %s7
  %s10 = scalar_select 0, %s9, %s7
  %11 = sst [smem:[#allocation3]] %s0
  $region1: #{proj_adapter_stack_pallas.1} parent=0
    #allocation4 [shape = 'u8[24576]{0}', space=vmem, size = 0x6000, scoped, tag = 'output window, operand 0']
    #allocation5 [shape = 's32[2]{0}', space=sflag, size = 0x8, scoped, tag = 'scoped memory for proj_adapter_stack_pallas.1']
    %12 = vsyncpa [#allocation5], 0
    %s13 = scalar_lea.sflag [#allocation5], 1
    %14 = vsyncpa %s13, 0
    loop: start=0, step=1, limit=4
    $region2: #{proj_adapter_stack_pallas.1} parent=1 // loop_pre_header
      _
    $region3: #{proj_adapter_stack_pallas.1} parent=1 // loop_header
      %s16 = sphi 0, %s20
      %p17 = scmp.ge.s32.totalorder %s16, 4
      %s26 = sphi 0, %s28
      %s29 = sphi 0, %s26
      %s30 = sphi 0, %s29
      %s46 = sphi 0, %s30
      %s54 = sphi 0, %s56
      %s57 = sphi 0, %s54
      %s58 = sphi 0, %s57
      %s74 = sphi 0, %s58
      %s82 = sphi 0, %s84
      %s85 = sphi 0, %s82
      %s86 = sphi 0, %s85
      %s102 = sphi 0, %s86
      %s110 = sphi 0, %s112
      %s113 = sphi 0, %s110
      %s114 = sphi 0, %s113
      %s130 = sphi 0, %s114
      %s138 = sphi 0, %s140
      %s141 = sphi 0, %s138
      %s142 = sphi 0, %s141
      %s158 = sphi 0, %s142
      %s164 = sphi 0, %s166
      %s167 = sphi 0, %s164
      %s168 = sphi 0, %s167
      %s184 = sphi 0, %s168
    $region4: #{proj_adapter_stack_pallas.1} parent=1 // loop_header_branch
      %19 = sbr.rel (%p17) target = $region8
    $region5: #{proj_adapter_stack_pallas.1} parent=1 // loop_body
      %s21 = ssub.s32 %s16, 1
      %s22 = ssub.s32 %s16, 2
      %s23 = sadd.s32 %s16, 1
      %s24 = ssub.s32 %s16, %s23
      %p25 = scmp.eq.s32.totalorder %s24, 0
      %s27 = sadd.s32 %s26, 1
      %s28 = scalar_select %p25, %s26, %s27
      %p31 = pneg %p25
      %p32 = scmp.eq.s32.totalorder %s16, 1
      %p33 = por %p31, %p32
      %p34 = scmp.ne.s32.totalorder %s26, %s29
      %p35 = scmp.eq.s32.totalorder %s16, 0
      %p36 = por %p34, %p35
      %p37 = scmp.ne.s32.totalorder %s26, %s29
      %p38 = scmp.eq.s32.totalorder %s21, 1
      %p39 = por %p37, %p38
      %p40 = scmp.ne.s32.totalorder %s29, %s30
      %p41 = scmp.eq.s32.totalorder %s21, 0
      %p42 = por %p40, %p41
      %p43 = scmp.ne.s32.totalorder %s29, %s30
      %p44 = scmp.eq.s32.totalorder %s22, 1
      %p45 = por %p43, %p44
      %p47 = scmp.ne.s32.totalorder %s30, %s46
      %p48 = scmp.eq.s32.totalorder %s22, 0
      %p49 = por %p47, %p48
      %s50 = sld [smem:[#allocation3]]
      %s51 = sld [smem:[#allocation3]]
      %s52 = ssub.s32 %s50, %s51
      %p53 = scmp.eq.s32.totalorder %s52, 0
      %s55 = sadd.s32 %s54, 1
      %s56 = scalar_select %p53, %s54, %s55
      %p59 = pneg %p53
      %p60 = scmp.eq.s32.totalorder %s16, 1
      %p61 = por %p59, %p60
      %p62 = scmp.ne.s32.totalorder %s54, %s57
      %p63 = scmp.eq.s32.totalorder %s16, 0
      %p64 = por %p62, %p63
      %p65 = scmp.ne.s32.totalorder %s54, %s57
      %p66 = scmp.eq.s32.totalorder %s21, 1
      %p67 = por %p65, %p66
      %p68 = scmp.ne.s32.totalorder %s57, %s58
      %p69 = scmp.eq.s32.totalorder %s21, 0
      %p70 = por %p68, %p69
      %p71 = scmp.ne.s32.totalorder %s57, %s58
      %p72 = scmp.eq.s32.totalorder %s22, 1
      %p73 = por %p71, %p72
      %p75 = scmp.ne.s32.totalorder %s58, %s74
      %p76 = scmp.eq.s32.totalorder %s22, 0
      %p77 = por %p75, %p76
      %s78 = sld [smem:[#allocation3]]
      %s79 = sld [smem:[#allocation3]]
      %s80 = ssub.s32 %s78, %s79
      %p81 = scmp.eq.s32.totalorder %s80, 0
      %s83 = sadd.s32 %s82, 1
      %s84 = scalar_select %p81, %s82, %s83
      %p87 = pneg %p81
      %p88 = scmp.eq.s32.totalorder %s16, 1
      %p89 = por %p87, %p88
      %p90 = scmp.ne.s32.totalorder %s82, %s85
      %p91 = scmp.eq.s32.totalorder %s16, 0
      %p92 = por %p90, %p91
      %p93 = scmp.ne.s32.totalorder %s82, %s85
      %p94 = scmp.eq.s32.totalorder %s21, 1
      %p95 = por %p93, %p94
      %p96 = scmp.ne.s32.totalorder %s85, %s86
      %p97 = scmp.eq.s32.totalorder %s21, 0
      %p98 = por %p96, %p97
      %p99 = scmp.ne.s32.totalorder %s85, %s86
      %p100 = scmp.eq.s32.totalorder %s22, 1
      %p101 = por %p99, %p100
      %p103 = scmp.ne.s32.totalorder %s86, %s102
      %p104 = scmp.eq.s32.totalorder %s22, 0
      %p105 = por %p103, %p104
      %s106 = sld [smem:[#allocation3]]
      %s107 = sld [smem:[#allocation3]]
      %s108 = ssub.s32 %s106, %s107
      %p109 = scmp.eq.s32.totalorder %s108, 0
      %s111 = sadd.s32 %s110, 1
      %s112 = scalar_select %p109, %s110, %s111
      %p115 = pneg %p109
      %p116 = scmp.eq.s32.totalorder %s16, 1
      %p117 = por %p115, %p116
      %p118 = scmp.ne.s32.totalorder %s110, %s113
      %p119 = scmp.eq.s32.totalorder %s16, 0
      %p120 = por %p118, %p119
      %p121 = scmp.ne.s32.totalorder %s110, %s113
      %p122 = scmp.eq.s32.totalorder %s21, 1
      %p123 = por %p121, %p122
      %p124 = scmp.ne.s32.totalorder %s113, %s114
      %p125 = scmp.eq.s32.totalorder %s21, 0
      %p126 = por %p124, %p125
      %p127 = scmp.ne.s32.totalorder %s113, %s114
      %p128 = scmp.eq.s32.totalorder %s22, 1
      %p129 = por %p127, %p128
      %p131 = scmp.ne.s32.totalorder %s114, %s130
      %p132 = scmp.eq.s32.totalorder %s22, 0
      %p133 = por %p131, %p132
      %s134 = sld [smem:[#allocation3]]
      %s135 = sld [smem:[#allocation3]]
      %s136 = ssub.s32 %s134, %s135
      %p137 = scmp.eq.s32.totalorder %s136, 0
      %s139 = sadd.s32 %s138, 1
      %s140 = scalar_select %p137, %s138, %s139
      %p143 = pneg %p137
      %p144 = scmp.eq.s32.totalorder %s16, 1
      %p145 = por %p143, %p144
      %p146 = scmp.ne.s32.totalorder %s138, %s141
      %p147 = scmp.eq.s32.totalorder %s16, 0
      %p148 = por %p146, %p147
      %p149 = scmp.ne.s32.totalorder %s138, %s141
      %p150 = scmp.eq.s32.totalorder %s21, 1
      %p151 = por %p149, %p150
      %p152 = scmp.ne.s32.totalorder %s141, %s142
      %p153 = scmp.eq.s32.totalorder %s21, 0
      %p154 = por %p152, %p153
      %p155 = scmp.ne.s32.totalorder %s141, %s142
      %p156 = scmp.eq.s32.totalorder %s22, 1
      %p157 = por %p155, %p156
      %p159 = scmp.ne.s32.totalorder %s142, %s158
      %p160 = scmp.eq.s32.totalorder %s22, 0
      %p161 = por %p159, %p160
      %s162 = ssub.s32 %s16, %s23
      %p163 = scmp.eq.s32.totalorder %s162, 0
      %s165 = sadd.s32 %s164, 1
      %s166 = scalar_select %p163, %s164, %s165
      %p169 = pneg %p163
      %p170 = scmp.eq.s32.totalorder %s16, 1
      %p171 = por %p169, %p170
      %p172 = scmp.ne.s32.totalorder %s164, %s167
      %p173 = scmp.eq.s32.totalorder %s16, 0
      %p174 = por %p172, %p173
      %p175 = scmp.ne.s32.totalorder %s164, %s167
      %p176 = scmp.eq.s32.totalorder %s21, 1
      %p177 = por %p175, %p176
      %p178 = scmp.ne.s32.totalorder %s167, %s168
      %p179 = scmp.eq.s32.totalorder %s21, 0
      %p180 = por %p178, %p179
      %p181 = scmp.ne.s32.totalorder %s167, %s168
      %p182 = scmp.eq.s32.totalorder %s22, 1
      %p183 = por %p181, %p182
      %p185 = scmp.ne.s32.totalorder %s168, %s184
      %p186 = scmp.eq.s32.totalorder %s22, 0
      %p187 = por %p185, %p186
      %p188 = scmp.le.s32.totalorder 1, %s16
      %p189 = scmp.lt.s32.totalorder %s16, 3
      %p190 = pnand %p188, %p189
      %p191 = pneg %p190
      // Predicated region
      $region9: #{proj_adapter_stack_pallas.1} parent=5 // pred_check
        _
      $region10: #{proj_adapter_stack_pallas.1} parent=5 // pred_check_branch
        %193 = sbr.rel (%p190) target = $region12
      $region11: #{proj_adapter_stack_pallas.1} parent=5 // pred_region
        %s194 = ssub.s32 %s16, 1
        // Predicated region
        $region13: #{proj_adapter_stack_pallas.1} parent=11 // pred_check
          %p195 = pneg %p70
        $region14: #{proj_adapter_stack_pallas.1} parent=11 // pred_check_branch
          %197 = sbr.rel (%p195) target = $region16
        $region15: #{proj_adapter_stack_pallas.1} parent=11 // pred_region
          %s198 = sld [smem:[#allocation3]]
          %p199 = scmp.lt.s32.totalorder %s198, 23
          %s200 = scalar_select %p199, %s198, 23
          %s201 = smul.addr %s200, 96
          %s202 = smul.addr %s201, 4
          %s203 = scalar_lea.vmem %s2, %s202
          %s204 = sld [smem:[#allocation3]]
        $region16: #{proj_adapter_stack_pallas.1} parent=11 // pred_fallthru
          _
        // Predicated region
        $region17: #{proj_adapter_stack_pallas.1} parent=11 // pred_check
          %p205 = pneg %p98
        $region18: #{proj_adapter_stack_pallas.1} parent=11 // pred_check_branch
          %207 = sbr.rel (%p205) target = $region20
        $region19: #{proj_adapter_stack_pallas.1} parent=11 // pred_region
          %s208 = sld [smem:[#allocation3]]
          %p209 = scmp.lt.s32.totalorder %s208, 23
          %s210 = scalar_select %p209, %s208, 23
          %s211 = scalar_lea.vmem %s3, %s210
          %s212 = sld [smem:[#allocation3]]
        $region20: #{proj_adapter_stack_pallas.1} parent=11 // pred_fallthru
          _
        // Predicated region
        $region21: #{proj_adapter_stack_pallas.1} parent=11 // pred_check
          %p213 = pneg %p126
        $region22: #{proj_adapter_stack_pallas.1} parent=11 // pred_check_branch
          %215 = sbr.rel (%p213) target = $region24
        $region23: #{proj_adapter_stack_pallas.1} parent=11 // pred_region
          %s216 = sld [smem:[#allocation3]]
          %p217 = scmp.lt.s32.totalorder %s216, 23
          %s218 = scalar_select %p217, %s216, 23
          %s219 = smul.addr %s218, 24
          %s220 = smul.addr %s219, 4
          %s221 = scalar_lea.vmem %s4, %s220
          %s222 = sld [smem:[#allocation3]]
        $region24: #{proj_adapter_stack_pallas.1} parent=11 // pred_fallthru
          _
        // Predicated region
        $region25: #{proj_adapter_stack_pallas.1} parent=11 // pred_check
          %p223 = pneg %p154
        $region26: #{proj_adapter_stack_pallas.1} parent=11 // pred_check_branch
          %225 = sbr.rel (%p223) target = $region28
        $region27: #{proj_adapter_stack_pallas.1} parent=11 // pred_region
          %s226 = sld [smem:[#allocation3]]
          %p227 = scmp.lt.s32.totalorder %s226, 23
          %s228 = scalar_select %p227, %s226, 23
          %s229 = smul.addr %s228, 6
          %s230 = scalar_lea.vmem %s5, %s229
          %s231 = sld [smem:[#allocation3]]
        $region28: #{proj_adapter_stack_pallas.1} parent=11 // pred_fallthru
          _
      $region12: #{proj_adapter_stack_pallas.1} parent=5 // pred_fallthru
        _
      %p232 = scmp.lt.s32.totalorder %s16, 2
      // Predicated region
      $region29: #{proj_adapter_stack_pallas.1} parent=5 // pred_check
        %p233 = pneg %p232
      $region30: #{proj_adapter_stack_pallas.1} parent=5 // pred_check_branch
        %235 = sbr.rel (%p233) target = $region32
      $region31: #{proj_adapter_stack_pallas.1} parent=5 // pred_region
        // Predicated region
        $region33: #{proj_adapter_stack_pallas.1} parent=31 // pred_check
          %p236 = pneg %p36
        $region34: #{proj_adapter_stack_pallas.1} parent=31 // pred_check_branch
          %238 = sbr.rel (%p236) target = $region36
        $region35: #{proj_adapter_stack_pallas.1} parent=31 // pred_region
          %p239 = scmp.lt.s32.totalorder %s16, 1
          %s240 = scalar_select %p239, %s16, 1
          %s241 = smul.addr %s240, 6
          %s242 = smul.addr %s241, 4
          %s243 = scalar_lea.vmem %s1, %s242
        $region36: #{proj_adapter_stack_pallas.1} parent=31 // pred_fallthru
          _
      $region32: #{proj_adapter_stack_pallas.1} parent=5 // pred_fallthru
        _
      %p244 = scmp.le.s32.totalorder 1, %s16
      %p245 = scmp.lt.s32.totalorder %s16, 3
      %p246 = pnand %p244, %p245
      %p247 = pneg %p246
      // Predicated region
      $region37: #{proj_adapter_stack_pallas.1} parent=5 // pred_check
        _
      $region38: #{proj_adapter_stack_pallas.1} parent=5 // pred_check_branch
        %249 = sbr.rel (%p246) target = $region40
      $region39: #{proj_adapter_stack_pallas.1} parent=5 // pred_region
        %s250 = ssub.s32 %s16, 1
        %p251 = scmp.lt.s32.totalorder %s21, 1
        %s252 = scalar_select %p251, %s21, 1
        %s253 = smul.addr %s252, 6
        %s254 = smul.addr %s253, 4
        %s255 = scalar_lea.vmem %s1, %s254
        %p256 = pneg %p42
        %p257 = pneg %p39
        %s258 = sld [smem:[#allocation3]]
        %p259 = scmp.lt.s32.totalorder %s258, 23
        %s260 = scalar_select %p259, %s258, 23
        %s261 = smul.addr %s260, 96
        %s262 = smul.addr %s261, 4
        %s263 = scalar_lea.vmem %s2, %s262
        %p264 = pneg %p70
        %p265 = pneg %p67
        %s266 = sld [smem:[#allocation3]]
        %p267 = scmp.lt.s32.totalorder %s266, 23
        %s268 = scalar_select %p267, %s266, 23
        %s269 = scalar_lea.vmem %s3, %s268
        %p270 = pneg %p98
        %p271 = pneg %p95
        %s272 = sld [smem:[#allocation3]]
        %p273 = scmp.lt.s32.totalorder %s272, 23
        %s274 = scalar_select %p273, %s272, 23
        %s275 = smul.addr %s274, 24
        %s276 = smul.addr %s275, 4
        %s277 = scalar_lea.vmem %s4, %s276
        %p278 = pneg %p126
        %p279 = pneg %p123
        %s280 = sld [smem:[#allocation3]]
        %p281 = scmp.lt.s32.totalorder %s280, 23
        %s282 = scalar_select %p281, %s280, 23
        %s283 = smul.addr %s282, 6
        %s284 = scalar_lea.vmem %s5, %s283
        %p285 = pneg %p154
        %p286 = pneg %p151
        %p287 = pneg %p180
        %p288 = pneg %p177
        %s289 = sand.u32 %s167, 1
        %s290 = scalar_lea.sflag [#allocation5], %s289
        %s291 = sand.u32 %s167, 1
        %s292 = smul.addr %s291, 24
        %s293 = scalar_lea.vmem [#allocation4], %s292
        %p294 = scmp.lt.s32.totalorder %s21, 1
        %s295 = scalar_select %p294, %s21, 1
        %s296 = smul.addr %s295, 6
        %s297 = smul.addr %s296, 4
        %s298 = scalar_lea.vmem %s1, %s297
        %s299 = sld [smem:[#allocation3]]
        %p300 = scmp.lt.s32.totalorder %s299, 23
        %s301 = scalar_select %p300, %s299, 23
        %s302 = smul.addr %s301, 96
        %s303 = smul.addr %s302, 4
        %s304 = scalar_lea.vmem %s2, %s303
        %s305 = sld [smem:[#allocation3]]
        %s306 = sld [smem:[#allocation3]]
        %p307 = scmp.lt.s32.totalorder %s306, 23
        %s308 = scalar_select %p307, %s306, 23
        %s309 = scalar_lea.vmem %s3, %s308
        %s310 = sld [smem:[#allocation3]]
        %s311 = sld [smem:[#allocation3]]
        %p312 = scmp.lt.s32.totalorder %s311, 23
        %s313 = scalar_select %p312, %s311, 23
        %s314 = smul.addr %s313, 24
        %s315 = smul.addr %s314, 4
        %s316 = scalar_lea.vmem %s4, %s315
        %s317 = sld [smem:[#allocation3]]
        %s318 = sld [smem:[#allocation3]]
        %p319 = scmp.lt.s32.totalorder %s318, 23
        %s320 = scalar_select %p319, %s318, 23
        %s321 = smul.addr %s320, 6
        %s322 = scalar_lea.vmem %s5, %s321
        %s323 = sld [smem:[#allocation3]]
        %v325 = vld [vmem:[%s298] sm:$0xff]
        %v326 = vld [vmem:[%s298 + $0x8] sm:$0xff]
        %v327 = vld [vmem:[%s298 + $0x10] sm:$0xff]
        %v328 = vunpack.c.l.bf16 %v325
        %v329 = vunpack.c.h.bf16 %v325
        %v330 = vunpack.c.l.bf16 %v326
        %v331 = vunpack.c.h.bf16 %v326
        %v332 = vunpack.c.l.bf16 %v327
        %v333 = vunpack.c.h.bf16 %v327
        %v334 = vld [vmem:[%s304] sm:$0xf]
        %v335 = vld [vmem:[%s304 + $0x4] sm:$0xf]
        %v336 = vld [vmem:[%s304 + $0x8] sm:$0xf]
        %v337 = vld [vmem:[%s304 + $0xc] sm:$0xf]
        %v338 = vld [vmem:[%s304 + $0x10] sm:$0xf]
        %v339 = vld [vmem:[%s304 + $0x14] sm:$0xf]
        %v340 = vld [vmem:[%s304 + $0x18] sm:$0xf]
        %v341 = vld [vmem:[%s304 + $0x1c] sm:$0xf]
        %v342 = vld [vmem:[%s304 + $0x20] sm:$0xf]
        %v343 = vld [vmem:[%s304 + $0x24] sm:$0xf]
        %v344 = vld [vmem:[%s304 + $0x28] sm:$0xf]
        %v345 = vld [vmem:[%s304 + $0x2c] sm:$0xf]
        %v346 = vld [vmem:[%s304 + $0x30] sm:$0xf]
        %v347 = vld [vmem:[%s304 + $0x34] sm:$0xf]
        %v348 = vld [vmem:[%s304 + $0x38] sm:$0xf]
        %v349 = vld [vmem:[%s304 + $0x3c] sm:$0xf]
        %v350 = vld [vmem:[%s304 + $0x40] sm:$0xf]
        %v351 = vld [vmem:[%s304 + $0x44] sm:$0xf]
        %v352 = vld [vmem:[%s304 + $0x48] sm:$0xf]
        %v353 = vld [vmem:[%s304 + $0x4c] sm:$0xf]
        %v354 = vld [vmem:[%s304 + $0x50] sm:$0xf]
        %v355 = vld [vmem:[%s304 + $0x54] sm:$0xf]
        %v356 = vld [vmem:[%s304 + $0x58] sm:$0xf]
        %v357 = vld [vmem:[%s304 + $0x5c] sm:$0xf]
        %v358 = vld [vmem:[%s304 + $0x60] sm:$0xf]
        %v359 = vld [vmem:[%s304 + $0x64] sm:$0xf]
        %v360 = vld [vmem:[%s304 + $0x68] sm:$0xf]
        %v361 = vld [vmem:[%s304 + $0x6c] sm:$0xf]
        %v362 = vld [vmem:[%s304 + $0x70] sm:$0xf]
        %v363 = vld [vmem:[%s304 + $0x74] sm:$0xf]
        %v364 = vld [vmem:[%s304 + $0x78] sm:$0xf]
        %v365 = vld [vmem:[%s304 + $0x7c] sm:$0xf]
        %v366 = vld [vmem:[%s304 + $0x80] sm:$0xf]
        %v367 = vld [vmem:[%s304 + $0x84] sm:$0xf]
        %v368 = vld [vmem:[%s304 + $0x88] sm:$0xf]
        %v369 = vld [vmem:[%s304 + $0x8c] sm:$0xf]
        %v370 = vld [vmem:[%s304 + $0x90] sm:$0xf]
        %v371 = vld [vmem:[%s304 + $0x94] sm:$0xf]
        %v372 = vld [vmem:[%s304 + $0x98] sm:$0xf]
        %v373 = vld [vmem:[%s304 + $0x9c] sm:$0xf]
        %v374 = vld [vmem:[%s304 + $0xa0] sm:$0xf]
        %v375 = vld [vmem:[%s304 + $0xa4] sm:$0xf]
        %v376 = vld [vmem:[%s304 + $0xa8] sm:$0xf]
        %v377 = vld [vmem:[%s304 + $0xac] sm:$0xf]
        %v378 = vld [vmem:[%s304 + $0xb0] sm:$0xf]
        %v379 = vld [vmem:[%s304 + $0xb4] sm:$0xf]
        %v380 = vld [vmem:[%s304 + $0xb8] sm:$0xf]
        %v381 = vld [vmem:[%s304 + $0xbc] sm:$0xf]
        %v382 = vld [vmem:[%s304 + $0xc0] sm:$0xf]
        %v383 = vld [vmem:[%s304 + $0xc4] sm:$0xf]
        %v384 = vld [vmem:[%s304 + $0xc8] sm:$0xf]
        %v385 = vld [vmem:[%s304 + $0xcc] sm:$0xf]
        %v386 = vld [vmem:[%s304 + $0xd0] sm:$0xf]
        %v387 = vld [vmem:[%s304 + $0xd4] sm:$0xf]
        %v388 = vld [vmem:[%s304 + $0xd8] sm:$0xf]
        %v389 = vld [vmem:[%s304 + $0xdc] sm:$0xf]
        %v390 = vld [vmem:[%s304 + $0xe0] sm:$0xf]
        %v391 = vld [vmem:[%s304 + $0xe4] sm:$0xf]
        %v392 = vld [vmem:[%s304 + $0xe8] sm:$0xf]
        %v393 = vld [vmem:[%s304 + $0xec] sm:$0xf]
        %v394 = vld [vmem:[%s304 + $0xf0] sm:$0xf]
        %v395 = vld [vmem:[%s304 + $0xf4] sm:$0xf]
        %v396 = vld [vmem:[%s304 + $0xf8] sm:$0xf]
        %v397 = vld [vmem:[%s304 + $0xfc] sm:$0xf]
        %v398 = vld [vmem:[%s304 + $0x100] sm:$0xf]
        %v399 = vld [vmem:[%s304 + $0x104] sm:$0xf]
        %v400 = vld [vmem:[%s304 + $0x108] sm:$0xf]
        %v401 = vld [vmem:[%s304 + $0x10c] sm:$0xf]
        %v402 = vld [vmem:[%s304 + $0x110] sm:$0xf]
        %v403 = vld [vmem:[%s304 + $0x114] sm:$0xf]
        %v404 = vld [vmem:[%s304 + $0x118] sm:$0xf]
        %v405 = vld [vmem:[%s304 + $0x11c] sm:$0xf]
        %v406 = vld [vmem:[%s304 + $0x120] sm:$0xf]
        %v407 = vld [vmem:[%s304 + $0x124] sm:$0xf]
        %v408 = vld [vmem:[%s304 + $0x128] sm:$0xf]
        %v409 = vld [vmem:[%s304 + $0x12c] sm:$0xf]
        %v410 = vld [vmem:[%s304 + $0x130] sm:$0xf]
        %v411 = vld [vmem:[%s304 + $0x134] sm:$0xf]
        %v412 = vld [vmem:[%s304 + $0x138] sm:$0xf]
        %v413 = vld [vmem:[%s304 + $0x13c] sm:$0xf]
        %v414 = vld [vmem:[%s304 + $0x140] sm:$0xf]
        %v415 = vld [vmem:[%s304 + $0x144] sm:$0xf]
        %v416 = vld [vmem:[%s304 + $0x148] sm:$0xf]
        %v417 = vld [vmem:[%s304 + $0x14c] sm:$0xf]
        %v418 = vld [vmem:[%s304 + $0x150] sm:$0xf]
        %v419 = vld [vmem:[%s304 + $0x154] sm:$0xf]
        %v420 = vld [vmem:[%s304 + $0x158] sm:$0xf]
        %v421 = vld [vmem:[%s304 + $0x15c] sm:$0xf]
        %v422 = vld [vmem:[%s304 + $0x160] sm:$0xf]
        %v423 = vld [vmem:[%s304 + $0x164] sm:$0xf]
        %v424 = vld [vmem:[%s304 + $0x168] sm:$0xf]
        %v425 = vld [vmem:[%s304 + $0x16c] sm:$0xf]
        %v426 = vld [vmem:[%s304 + $0x170] sm:$0xf]
        %v427 = vld [vmem:[%s304 + $0x174] sm:$0xf]
        %v428 = vld [vmem:[%s304 + $0x178] sm:$0xf]
        %v429 = vld [vmem:[%s304 + $0x17c] sm:$0xf]
        %v430 = vld [vmem:[%s309] sm:$0x1]
        %v431 = vunpack.c.l.bf16 %v430
        %v432 = vlaneseq
        %v433 = vshrl.u32 %v432, 7
        %v434 = vsub.s32 0, %v433
        %v435 = vrot.slane %v431, %v434
        %v439 = vunpack.c.l.b16 %v325
        %v440 = vunpack.c.h.b16 %v325
        %v441 = vunpack.c.l.b16 %v326
        %v442 = vunpack.c.h.b16 %v326
        %v443 = vunpack.c.l.b16 %v327
        %v444 = vunpack.c.h.b16 %v327
        %v445 = vpack.c.b16 %v439, %v439
        %v446 = vpack.c.b16 %v440, %v440
        %v447 = vpack.c.b16 %v441, %v441
        %v448 = vpack.c.b16 %v442, %v442
        %v449 = vpack.c.b16 %v443, %v443
        %v450 = vpack.c.b16 %v444, %v444
        %v553 = vunpack.c.l.b16 %v334
        %v554 = vunpack.c.l.b16 %v335
        %v555 = vunpack.c.l.b16 %v336
        %v556 = vunpack.c.l.b16 %v337
        %v557 = vunpack.c.l.b16 %v338
        %v558 = vunpack.c.l.b16 %v339
        %v559 = vunpack.c.l.b16 %v340
        %v560 = vunpack.c.l.b16 %v341
        %v561 = vunpack.c.l.b16 %v342
        %v562 = vunpack.c.l.b16 %v343
        %v563 = vunpack.c.l.b16 %v344
        %v564 = vunpack.c.l.b16 %v345
        %v565 = vunpack.c.l.b16 %v346
        %v566 = vunpack.c.l.b16 %v347
        %v567 = vunpack.c.l.b16 %v348
        %v568 = vunpack.c.l.b16 %v349
        %v569 = vunpack.c.l.b16 %v350
        %v570 = vunpack.c.l.b16 %v351
        %v571 = vunpack.c.l.b16 %v352
        %v572 = vunpack.c.l.b16 %v353
        %v573 = vunpack.c.l.b16 %v354
        %v574 = vunpack.c.l.b16 %v355
        %v575 = vunpack.c.l.b16 %v356
        %v576 = vunpack.c.l.b16 %v357
        %v577 = vunpack.c.l.b16 %v358
        %v578 = vunpack.c.l.b16 %v359
        %v579 = vunpack.c.l.b16 %v360
        %v580 = vunpack.c.l.b16 %v361
        %v581 = vunpack.c.l.b16 %v362
        %v582 = vunpack.c.l.b16 %v363
        %v583 = vunpack.c.l.b16 %v364
        %v584 = vunpack.c.l.b16 %v365
        %v585 = vunpack.c.l.b16 %v366
        %v586 = vunpack.c.l.b16 %v367
        %v587 = vunpack.c.l.b16 %v368
        %v588 = vunpack.c.l.b16 %v369
        %v589 = vunpack.c.l.b16 %v370
        %v590 = vunpack.c.l.b16 %v371
        %v591 = vunpack.c.l.b16 %v372
        %v592 = vunpack.c.l.b16 %v373
        %v593 = vunpack.c.l.b16 %v374
        %v594 = vunpack.c.l.b16 %v375
        %v595 = vunpack.c.l.b16 %v376
        %v596 = vunpack.c.l.b16 %v377
        %v597 = vunpack.c.l.b16 %v378
        %v598 = vunpack.c.l.b16 %v379
        %v599 = vunpack.c.l.b16 %v380
        %v600 = vunpack.c.l.b16 %v381
        %v601 = vunpack.c.l.b16 %v382
        %v602 = vunpack.c.l.b16 %v383
        %v603 = vunpack.c.l.b16 %v384
        %v604 = vunpack.c.l.b16 %v385
        %v605 = vunpack.c.l.b16 %v386
        %v606 = vunpack.c.l.b16 %v387
        %v607 = vunpack.c.l.b16 %v388
        %v608 = vunpack.c.l.b16 %v389
        %v609 = vunpack.c.l.b16 %v390
        %v610 = vunpack.c.l.b16 %v391
        %v611 = vunpack.c.l.b16 %v392
        %v612 = vunpack.c.l.b16 %v393
        %v613 = vunpack.c.l.b16 %v394
        %v614 = vunpack.c.l.b16 %v395
        %v615 = vunpack.c.l.b16 %v396
        %v616 = vunpack.c.l.b16 %v397
        %v617 = vunpack.c.l.b16 %v398
        %v618 = vunpack.c.l.b16 %v399
        %v619 = vunpack.c.l.b16 %v400
        %v620 = vunpack.c.l.b16 %v401
        %v621 = vunpack.c.l.b16 %v402
        %v622 = vunpack.c.l.b16 %v403
        %v623 = vunpack.c.l.b16 %v404
        %v624 = vunpack.c.l.b16 %v405
        %v625 = vunpack.c.l.b16 %v406
        %v626 = vunpack.c.l.b16 %v407
        %v627 = vunpack.c.l.b16 %v408
        %v628 = vunpack.c.l.b16 %v409
        %v629 = vunpack.c.l.b16 %v410
        %v630 = vunpack.c.l.b16 %v411
        %v631 = vunpack.c.l.b16 %v412
        %v632 = vunpack.c.l.b16 %v413
        %v633 = vunpack.c.l.b16 %v414
        %v634 = vunpack.c.l.b16 %v415
        %v635 = vunpack.c.l.b16 %v416
        %v636 = vunpack.c.l.b16 %v417
        %v637 = vunpack.c.l.b16 %v418
        %v638 = vunpack.c.l.b16 %v419
        %v639 = vunpack.c.l.b16 %v420
        %v640 = vunpack.c.l.b16 %v421
        %v641 = vunpack.c.l.b16 %v422
        %v642 = vunpack.c.l.b16 %v423
        %v643 = vunpack.c.l.b16 %v424
        %v644 = vunpack.c.l.b16 %v425
        %v645 = vunpack.c.l.b16 %v426
        %v646 = vunpack.c.l.b16 %v427
        %v647 = vunpack.c.l.b16 %v428
        %v648 = vunpack.c.l.b16 %v429
        %v649 = vpack.c.b16 %v554, %v553
        %v650 = vpack.c.b16 %v556, %v555
        %v651 = vpack.c.b16 %v558, %v557
        %v652 = vpack.c.b16 %v560, %v559
        %v653 = vpack.c.b16 %v562, %v561
        %v654 = vpack.c.b16 %v564, %v563
        %v655 = vpack.c.b16 %v566, %v565
        %v656 = vpack.c.b16 %v568, %v567
        %v657 = vpack.c.b16 %v570, %v569
        %v658 = vpack.c.b16 %v572, %v571
        %v659 = vpack.c.b16 %v574, %v573
        %v660 = vpack.c.b16 %v576, %v575
        %v661 = vpack.c.b16 %v578, %v577
        %v662 = vpack.c.b16 %v580, %v579
        %v663 = vpack.c.b16 %v582, %v581
        %v664 = vpack.c.b16 %v584, %v583
        %v665 = vpack.c.b16 %v586, %v585
        %v666 = vpack.c.b16 %v588, %v587
        %v667 = vpack.c.b16 %v590, %v589
        %v668 = vpack.c.b16 %v592, %v591
        %v669 = vpack.c.b16 %v594, %v593
        %v670 = vpack.c.b16 %v596, %v595
        %v671 = vpack.c.b16 %v598, %v597
        %v672 = vpack.c.b16 %v600, %v599
        %v673 = vpack.c.b16 %v602, %v601
        %v674 = vpack.c.b16 %v604, %v603
        %v675 = vpack.c.b16 %v606, %v605
        %v676 = vpack.c.b16 %v608, %v607
        %v677 = vpack.c.b16 %v610, %v609
        %v678 = vpack.c.b16 %v612, %v611
        %v679 = vpack.c.b16 %v614, %v613
        %v680 = vpack.c.b16 %v616, %v615
        %v681 = vpack.c.b16 %v618, %v617
        %v682 = vpack.c.b16 %v620, %v619
        %v683 = vpack.c.b16 %v622, %v621
        %v684 = vpack.c.b16 %v624, %v623
        %v685 = vpack.c.b16 %v626, %v625
        %v686 = vpack.c.b16 %v628, %v627
        %v687 = vpack.c.b16 %v630, %v629
        %v688 = vpack.c.b16 %v632, %v631
        %v689 = vpack.c.b16 %v634, %v633
        %v690 = vpack.c.b16 %v636, %v635
        %v691 = vpack.c.b16 %v638, %v637
        %v692 = vpack.c.b16 %v640, %v639
        %v693 = vpack.c.b16 %v642, %v641
        %v694 = vpack.c.b16 %v644, %v643
        %v695 = vpack.c.b16 %v646, %v645
        %v696 = vpack.c.b16 %v648, %v647
        %745 = vmatprep.subr.bf16.mxu0 0
        %746 = vmatpush1.bf16.msra.mxu0 %v649
        %747 = vmatprep.subr.bf16.mxu0 0
        %748 = vmatpush1.bf16.msra.mxu0 %v650
        %749 = vmatprep.subr.bf16.mxu0 0
        %750 = vmatpush1.bf16.msra.mxu0 %v651
        %751 = vmatprep.subr.bf16.mxu0 0
        %752 = vmatpush1.bf16.msra.mxu0 %v652
        %753 = vmatprep.subr.bf16.mxu0 0
        %754 = vmatpush1.bf16.msra.mxu0 %v653
        %755 = vmatprep.subr.bf16.mxu0 0
        %756 = vmatpush1.bf16.msra.mxu0 %v654
        %757 = vmatprep.subr.bf16.mxu0 0
        %758 = vmatpush1.bf16.msra.mxu0 %v655
        %759 = vmatprep.subr.bf16.mxu0 0
        %760 = vmatpush1.bf16.msra.mxu0 %v656
        %761 = vmatprep.subr.bf16.mxu0 0
        %762 = vmatpush1.bf16.msra.mxu0 %v657
        %763 = vmatprep.subr.bf16.mxu0 0
        %764 = vmatpush1.bf16.msra.mxu0 %v658
        %765 = vmatprep.subr.bf16.mxu0 0
        %766 = vmatpush1.bf16.msra.mxu0 %v659
        %767 = vmatprep.subr.bf16.mxu0 0
        %768 = vmatpush1.bf16.msra.mxu0 %v660
        %769 = vmatprep.subr.bf16.mxu0 0
        %770 = vmatpush1.bf16.msra.mxu0 %v661
        %771 = vmatprep.subr.bf16.mxu0 0
        %772 = vmatpush1.bf16.msra.mxu0 %v662
        %773 = vmatprep.subr.bf16.mxu0 0
        %774 = vmatpush1.bf16.msra.mxu0 %v663
        %775 = vmatprep.subr.bf16.mxu0 0
        %776 = vmatpush1.bf16.msra.mxu0 %v664
        %777 = vmatprep.mubr.bf16.mxu0 %v446
        %778 = vmatmul.mubr.bf16.gmra.mrb[0].mxu0 %v445
        %v779 = vpop.f32.mrb[0].mxu0
        %v780 = vadd.f32 %v435, %v779
        %v781 = vpop.f32.mrb[0].mxu0
        %v782 = vpop.f32.mrb[0].mxu0
        %v783 = vpop.f32.mrb[0].mxu0
        %784 = vdwg.mxu0
        %785 = vmatprep.subr.bf16.mxu0 0
        %786 = vmatpush1.bf16.msra.mxu0 %v665
        %787 = vmatprep.subr.bf16.mxu0 0
        %788 = vmatpush1.bf16.msra.mxu0 %v666
        %789 = vmatprep.subr.bf16.mxu0 0
        %790 = vmatpush1.bf16.msra.mxu0 %v667
        %791 = vmatprep.subr.bf16.mxu0 0
        %792 = vmatpush1.bf16.msra.mxu0 %v668
        %793 = vmatprep.subr.bf16.mxu0 0
        %794 = vmatpush1.bf16.msra.mxu0 %v669
        %795 = vmatprep.subr.bf16.mxu0 0
        %796 = vmatpush1.bf16.msra.mxu0 %v670
        %797 = vmatprep.subr.bf16.mxu0 0
        %798 = vmatpush1.bf16.msra.mxu0 %v671
        %799 = vmatprep.subr.bf16.mxu0 0
        %800 = vmatpush1.bf16.msra.mxu0 %v672
        %801 = vmatprep.subr.bf16.mxu0 0
        %802 = vmatpush1.bf16.msra.mxu0 %v673
        %803 = vmatprep.subr.bf16.mxu0 0
        %804 = vmatpush1.bf16.msra.mxu0 %v674
        %805 = vmatprep.subr.bf16.mxu0 0
        %806 = vmatpush1.bf16.msra.mxu0 %v675
        %807 = vmatprep.subr.bf16.mxu0 0
        %808 = vmatpush1.bf16.msra.mxu0 %v676
        %809 = vmatprep.subr.bf16.mxu0 0
        %810 = vmatpush1.bf16.msra.mxu0 %v677
        %811 = vmatprep.subr.bf16.mxu0 0
        %812 = vmatpush1.bf16.msra.mxu0 %v678
        %813 = vmatprep.subr.bf16.mxu0 0
        %814 = vmatpush1.bf16.msra.mxu0 %v679
        %815 = vmatprep.subr.bf16.mxu0 0
        %816 = vmatpush1.bf16.msra.mxu0 %v680
        %817 = vmatprep.mubr.bf16.mxu0 %v448
        %818 = vmatmul.mubr.bf16.gmra.mrb[0].mxu0 %v447
        %v819 = vpop.f32.mrb[0].mxu0
        %v820 = vadd.f32 %v780, %v819
        %v821 = vpop.f32.mrb[0].mxu0
        %v822 = vpop.f32.mrb[0].mxu0
        %v823 = vpop.f32.mrb[0].mxu0
        %824 = vdwg.mxu0
        %825 = vmatprep.subr.bf16.mxu0 0
        %826 = vmatpush1.bf16.msra.mxu0 %v681
        %827 = vmatprep.subr.bf16.mxu0 0
        %828 = vmatpush1.bf16.msra.mxu0 %v682
        %829 = vmatprep.subr.bf16.mxu0 0
        %830 = vmatpush1.bf16.msra.mxu0 %v683
        %831 = vmatprep.subr.bf16.mxu0 0
        %832 = vmatpush1.bf16.msra.mxu0 %v684
        %833 = vmatprep.subr.bf16.mxu0 0
        %834 = vmatpush1.bf16.msra.mxu0 %v685
        %835 = vmatprep.subr.bf16.mxu0 0
        %836 = vmatpush1.bf16.msra.mxu0 %v686
        %837 = vmatprep.subr.bf16.mxu0 0
        %838 = vmatpush1.bf16.msra.mxu0 %v687
        %839 = vmatprep.subr.bf16.mxu0 0
        %840 = vmatpush1.bf16.msra.mxu0 %v688
        %841 = vmatprep.subr.bf16.mxu0 0
        %842 = vmatpush1.bf16.msra.mxu0 %v689
        %843 = vmatprep.subr.bf16.mxu0 0
        %844 = vmatpush1.bf16.msra.mxu0 %v690
        %845 = vmatprep.subr.bf16.mxu0 0
        %846 = vmatpush1.bf16.msra.mxu0 %v691
        %847 = vmatprep.subr.bf16.mxu0 0
        %848 = vmatpush1.bf16.msra.mxu0 %v692
        %849 = vmatprep.subr.bf16.mxu0 0
        %850 = vmatpush1.bf16.msra.mxu0 %v693
        %851 = vmatprep.subr.bf16.mxu0 0
        %852 = vmatpush1.bf16.msra.mxu0 %v694
        %853 = vmatprep.subr.bf16.mxu0 0
        %854 = vmatpush1.bf16.msra.mxu0 %v695
        %855 = vmatprep.subr.bf16.mxu0 0
        %856 = vmatpush1.bf16.msra.mxu0 %v696
        %857 = vmatprep.mubr.bf16.mxu0 %v450
        %858 = vmatmul.mubr.bf16.gmra.mrb[0].mxu0 %v449
        %v859 = vpop.f32.mrb[0].mxu0
        %v860 = vadd.f32 %v820, %v859
        %v861 = vpop.f32.mrb[0].mxu0
        %v862 = vpop.f32.mrb[0].mxu0
        %v863 = vpop.f32.mrb[0].mxu0
        %864 = vdwg.mxu0
        %v865 = vmul.f32 %v860, 0.5
        %v866 = vmul.f32 %v860, 0.70710677
        %v867 = verf.f32.pop %v866
        %v868 = vadd.f32 %v867, 1.0
        %v869 = vmul.f32 %v865, %v868
        %v870 = vpack.c.bf16 %v869, %v869
        %v871 = vld [vmem:[%s316] sm:$0xff]
        %v872 = vld [vmem:[%s316 + $0x8] sm:$0xff]
        %v873 = vld [vmem:[%s316 + $0x10] sm:$0xff]
        %v874 = vld [vmem:[%s316 + $0x18] sm:$0xff]
        %v875 = vld [vmem:[%s316 + $0x20] sm:$0xff]
        %v876 = vld [vmem:[%s316 + $0x28] sm:$0xff]
        %v877 = vld [vmem:[%s316 + $0x30] sm:$0xff]
        %v878 = vld [vmem:[%s316 + $0x38] sm:$0xff]
        %v879 = vld [vmem:[%s316 + $0x40] sm:$0xff]
        %v880 = vld [vmem:[%s316 + $0x48] sm:$0xff]
        %v881 = vld [vmem:[%s316 + $0x50] sm:$0xff]
        %v882 = vld [vmem:[%s316 + $0x58] sm:$0xff]
        %v883 = vld [vmem:[%s322] sm:$0x3f]
        %v884 = vunpack.c.l.bf16 %v883
        %v885 = vunpack.c.h.bf16 %v883
        %v888 = vlaneseq
        %v889 = vshrl.u32 %v888, 7
        %v890 = vsub.s32 0, %v889
        %v891 = vrot.slane %v884, %v890
        %v892 = vlaneseq
        %v893 = vshrl.u32 %v892, 7
        %v894 = vsub.s32 2, %v893
        %v895 = vrot.slane %v884, %v894
        %v896 = vlaneseq
        %v897 = vshrl.u32 %v896, 7
        %v898 = vsub.s32 4, %v897
        %v899 = vrot.slane %v884, %v898
        %v900 = vlaneseq
        %v901 = vshrl.u32 %v900, 7
        %v902 = vsub.s32 6, %v901
        %v903 = vrot.slane %v884, %v902
        %v904 = vlaneseq
        %v905 = vshrl.u32 %v904, 7
        %v906 = vsub.s32 0, %v905
        %v907 = vrot.slane %v885, %v906
        %v908 = vlaneseq
        %v909 = vshrl.u32 %v908, 7
        %v910 = vsub.s32 2, %v909
        %v911 = vrot.slane %v885, %v910
        %v918 = vlaneseq
        %v919 = vshrl.u32 %v918, 7
        %v920 = vsub.s32 0, %v919
        %v921 = vrot.slane %v891, %v920
        %v922 = vlaneseq
        %v923 = vshrl.u32 %v922, 7
        %v924 = vsub.s32 0, %v923
        %v925 = vrot.slane %v895, %v924
        %v926 = vlaneseq
        %v927 = vshrl.u32 %v926, 7
        %v928 = vsub.s32 0, %v927
        %v929 = vrot.slane %v899, %v928
        %v930 = vlaneseq
        %v931 = vshrl.u32 %v930, 7
        %v932 = vsub.s32 0, %v931
        %v933 = vrot.slane %v903, %v932
        %v934 = vlaneseq
        %v935 = vshrl.u32 %v934, 7
        %v936 = vsub.s32 0, %v935
        %v937 = vrot.slane %v907, %v936
        %v938 = vlaneseq
        %v939 = vshrl.u32 %v938, 7
        %v940 = vsub.s32 0, %v939
        %v941 = vrot.slane %v911, %v940
        %v954 = vunpack.c.l.b16 %v871
        %v955 = vunpack.c.h.b16 %v871
        %v956 = vunpack.c.l.b16 %v872
        %v957 = vunpack.c.h.b16 %v872
        %v958 = vunpack.c.l.b16 %v873
        %v959 = vunpack.c.h.b16 %v873
        %v960 = vunpack.c.l.b16 %v874
        %v961 = vunpack.c.h.b16 %v874
        %v962 = vunpack.c.l.b16 %v875
        %v963 = vunpack.c.h.b16 %v875
        %v964 = vunpack.c.l.b16 %v876
        %v965 = vunpack.c.h.b16 %v876
        %v966 = vunpack.c.l.b16 %v877
        %v967 = vunpack.c.h.b16 %v877
        %v968 = vunpack.c.l.b16 %v878
        %v969 = vunpack.c.h.b16 %v878
        %v970 = vunpack.c.l.b16 %v879
        %v971 = vunpack.c.h.b16 %v879
        %v972 = vunpack.c.l.b16 %v880
        %v973 = vunpack.c.h.b16 %v880
        %v974 = vunpack.c.l.b16 %v881
        %v975 = vunpack.c.h.b16 %v881
        %v976 = vunpack.c.l.b16 %v882
        %v977 = vunpack.c.h.b16 %v882
        %v978 = vpack.c.b16 %v960, %v954
        %v979 = vpack.c.b16 %v961, %v955
        %v980 = vpack.c.b16 %v962, %v956
        %v981 = vpack.c.b16 %v963, %v957
        %v982 = vpack.c.b16 %v964, %v958
        %v983 = vpack.c.b16 %v965, %v959
        %v984 = vpack.c.b16 %v972, %v966
        %v985 = vpack.c.b16 %v973, %v967
        %v986 = vpack.c.b16 %v974, %v968
        %v987 = vpack.c.b16 %v975, %v969
        %v988 = vpack.c.b16 %v976, %v970
        %v989 = vpack.c.b16 %v977, %v971
        %vm1002 = vcmask 261120
        %v1004 = vsel %vm1002, %v870, 0
        %1006 = vmatprep.subr.bf16.mxu0 %v979
        %1007 = vmatpush1.bf16.msra.mxu0 %v978
        %1008 = vmatprep.subr.bf16.mxu0 %v985
        %1009 = vmatpush1.bf16.msra.mxu0 %v984
        %1010 = vmatprep.subr.bf16.mxu0 0
        %1011 = vmatpush1.bf16.msra.mxu0 0
        %1012 = vmatprep.subr.bf16.mxu0 0
        %1013 = vmatpush1.bf16.msra.mxu0 0
        %1014 = vmatprep.subr.bf16.mxu0 0
        %1015 = vmatpush1.bf16.msra.mxu0 0
        %1016 = vmatprep.subr.bf16.mxu0 0
        %1017 = vmatpush1.bf16.msra.mxu0 0
        %1018 = vmatprep.subr.bf16.mxu0 0
        %1019 = vmatpush1.bf16.msra.mxu0 0
        %1020 = vmatprep.subr.bf16.mxu0 0
        %1021 = vmatpush1.bf16.msra.mxu0 0
        %1022 = vmatprep.subr.bf16.mxu0 0
        %1023 = vmatpush1.bf16.msra.mxu0 0
        %1024 = vmatprep.subr.bf16.mxu0 0
        %1025 = vmatpush1.bf16.msra.mxu0 0
        %1026 = vmatprep.subr.bf16.mxu0 0
        %1027 = vmatpush1.bf16.msra.mxu0 0
        %1028 = vmatprep.subr.bf16.mxu0 0
        %1029 = vmatpush1.bf16.msra.mxu0 0
        %1030 = vmatprep.subr.bf16.mxu0 0
        %1031 = vmatpush1.bf16.msra.mxu0 0
        %1032 = vmatprep.subr.bf16.mxu0 0
        %1033 = vmatpush1.bf16.msra.mxu0 0
        %1034 = vmatprep.subr.bf16.mxu0 0
        %1035 = vmatpush1.bf16.msra.mxu0 0
        %1036 = vmatprep.subr.bf16.mxu0 0
        %1037 = vmatpush1.bf16.msra.mxu0 0
        %1038 = vmatprep.mubr.bf16.mxu0 0
        %1039 = vmatmul.mubr.bf16.gmra.mrb[0].mxu0 %v1004
        %v1040 = vpop.f32.mrb[0].mxu0
        %v1041 = vadd.f32 %v921, %v1040
        %v1042 = vpop.f32.mrb[0].mxu0
        %v1043 = vadd.f32 %v925, %v1042
        %v1044 = vpop.f32.mrb[0].mxu0
        %v1045 = vpop.f32.mrb[0].mxu0
        %1046 = vdwg.mxu0
        %1047 = vmatprep.subr.bf16.mxu0 %v981
        %1048 = vmatpush1.bf16.msra.mxu0 %v980
        %1049 = vmatprep.subr.bf16.mxu0 %v987
        %1050 = vmatpush1.bf16.msra.mxu0 %v986
        %1051 = vmatprep.subr.bf16.mxu0 0
        %1052 = vmatpush1.bf16.msra.mxu0 0
        %1053 = vmatprep.subr.bf16.mxu0 0
        %1054 = vmatpush1.bf16.msra.mxu0 0
        %1055 = vmatprep.subr.bf16.mxu0 0
        %1056 = vmatpush1.bf16.msra.mxu0 0
        %1057 = vmatprep.subr.bf16.mxu0 0
        %1058 = vmatpush1.bf16.msra.mxu0 0
        %1059 = vmatprep.subr.bf16.mxu0 0
        %1060 = vmatpush1.bf16.msra.mxu0 0
        %1061 = vmatprep.subr.bf16.mxu0 0
        %1062 = vmatpush1.bf16.msra.mxu0 0
        %1063 = vmatprep.subr.bf16.mxu0 0
        %1064 = vmatpush1.bf16.msra.mxu0 0
        %1065 = vmatprep.subr.bf16.mxu0 0
        %1066 = vmatpush1.bf16.msra.mxu0 0
        %1067 = vmatprep.subr.bf16.mxu0 0
        %1068 = vmatpush1.bf16.msra.mxu0 0
        %1069 = vmatprep.subr.bf16.mxu0 0
        %1070 = vmatpush1.bf16.msra.mxu0 0
        %1071 = vmatprep.subr.bf16.mxu0 0
        %1072 = vmatpush1.bf16.msra.mxu0 0
        %1073 = vmatprep.subr.bf16.mxu0 0
        %1074 = vmatpush1.bf16.msra.mxu0 0
        %1075 = vmatprep.subr.bf16.mxu0 0
        %1076 = vmatpush1.bf16.msra.mxu0 0
        %1077 = vmatprep.subr.bf16.mxu0 0
        %1078 = vmatpush1.bf16.msra.mxu0 0
        %1079 = vmatprep.mubr.bf16.mxu0 0
        %1080 = vmatmul.mubr.bf16.gmra.mrb[0].mxu0 %v1004
        %v1081 = vpop.f32.mrb[0].mxu0
        %v1082 = vadd.f32 %v929, %v1081
        %v1083 = vpop.f32.mrb[0].mxu0
        %v1084 = vadd.f32 %v933, %v1083
        %v1085 = vpop.f32.mrb[0].mxu0
        %v1086 = vpop.f32.mrb[0].mxu0
        %1087 = vdwg.mxu0
        %1088 = vmatprep.subr.bf16.mxu0 %v983
        %1089 = vmatpush1.bf16.msra.mxu0 %v982
        %1090 = vmatprep.subr.bf16.mxu0 %v989
        %1091 = vmatpush1.bf16.msra.mxu0 %v988
        %1092 = vmatprep.subr.bf16.mxu0 0
        %1093 = vmatpush1.bf16.msra.mxu0 0
        %1094 = vmatprep.subr.bf16.mxu0 0
        %1095 = vmatpush1.bf16.msra.mxu0 0
        %1096 = vmatprep.subr.bf16.mxu0 0
        %1097 = vmatpush1.bf16.msra.mxu0 0
        %1098 = vmatprep.subr.bf16.mxu0 0
        %1099 = vmatpush1.bf16.msra.mxu0 0
        %1100 = vmatprep.subr.bf16.mxu0 0
        %1101 = vmatpush1.bf16.msra.mxu0 0
        %1102 = vmatprep.subr.bf16.mxu0 0
        %1103 = vmatpush1.bf16.msra.mxu0 0
        %1104 = vmatprep.subr.bf16.mxu0 0
        %1105 = vmatpush1.bf16.msra.mxu0 0
        %1106 = vmatprep.subr.bf16.mxu0 0
        %1107 = vmatpush1.bf16.msra.mxu0 0
        %1108 = vmatprep.subr.bf16.mxu0 0
        %1109 = vmatpush1.bf16.msra.mxu0 0
        %1110 = vmatprep.subr.bf16.mxu0 0
        %1111 = vmatpush1.bf16.msra.mxu0 0
        %1112 = vmatprep.subr.bf16.mxu0 0
        %1113 = vmatpush1.bf16.msra.mxu0 0
        %1114 = vmatprep.subr.bf16.mxu0 0
        %1115 = vmatpush1.bf16.msra.mxu0 0
        %1116 = vmatprep.subr.bf16.mxu0 0
        %1117 = vmatpush1.bf16.msra.mxu0 0
        %1118 = vmatprep.subr.bf16.mxu0 0
        %1119 = vmatpush1.bf16.msra.mxu0 0
        %1120 = vmatprep.mubr.bf16.mxu0 0
        %1121 = vmatmul.mubr.bf16.gmra.mrb[0].mxu0 %v1004
        %v1122 = vpop.f32.mrb[0].mxu0
        %v1123 = vadd.f32 %v937, %v1122
        %v1124 = vpop.f32.mrb[0].mxu0
        %v1125 = vadd.f32 %v941, %v1124
        %v1126 = vpop.f32.mrb[0].mxu0
        %v1127 = vpop.f32.mrb[0].mxu0
        %1128 = vdwg.mxu0
        %v1129 = vadd.f32 %v1041, %v328
        %v1130 = vadd.f32 %v1043, %v329
        %v1131 = vadd.f32 %v1082, %v330
        %v1132 = vadd.f32 %v1084, %v331
        %v1133 = vadd.f32 %v1123, %v332
        %v1134 = vadd.f32 %v1125, %v333
        %v1135 = vpack.c.bf16 %v1129, %v1129
        %v1136 = vpack.c.bf16 %v1130, %v1130
        %v1137 = vpack.c.bf16 %v1131, %v1131
        %v1138 = vpack.c.bf16 %v1132, %v1132
        %v1139 = vpack.c.bf16 %v1133, %v1133
        %v1140 = vpack.c.bf16 %v1134, %v1134
        %v1147 = vunpack.c.l.b16 %v1135
        %v1148 = vunpack.c.l.b16 %v1136
        %v1149 = vunpack.c.l.b16 %v1137
        %v1150 = vunpack.c.l.b16 %v1138
        %v1151 = vunpack.c.l.b16 %v1139
        %v1152 = vunpack.c.l.b16 %v1140
        %v1153 = vpack.c.b16 %v1148, %v1147
        %v1154 = vpack.c.b16 %v1150, %v1149
        %v1155 = vpack.c.b16 %v1152, %v1151
        %1159 = vst [vmem:[%s293] sm:$0xff] %v1153
        %1160 = vst [vmem:[%s293 + $0x8] sm:$0xff] %v1154
        %1161 = vst [vmem:[%s293 + $0x10] sm:$0xff] %v1155
        %s1162 = sand.u32 %s167, 1
        %s1163 = scalar_lea.sflag [#allocation5], %s1162
        %s1164 = sand.u32 %s167, 1
        %s1165 = smul.addr %s1164, 24
        %s1166 = scalar_lea.vmem [#allocation4], %s1165
        // Predicated region
        $region41: #{proj_adapter_stack_pallas.1} parent=39 // pred_check
          %p1167 = pneg %p177
        $region42: #{proj_adapter_stack_pallas.1} parent=39 // pred_check_branch
          %1169 = sbr.rel (%p1167) target = $region44
        $region43: #{proj_adapter_stack_pallas.1} parent=39 // pred_region
          %s1171 = ssub.s32 384, 384
          %1172 = vsyncadd %s1163, %s1171
          %s1173 = smul.addr %s21, 6
          %s1174 = smul.addr %s1173, 64
          %s1175 = scalar_lea.hbm %s6, %s1174
          %s1177 = sshll.u32 %s1166, 4
          %s1178 = int_to_ptr.vmem [resolvable:$true] %s1177
          %1180 = dma.vmem_to_hbm [thread:$0]  %s1178, 384, %s1175, %s1163
        $region44: #{proj_adapter_stack_pallas.1} parent=39 // pred_fallthru
          _
      $region40: #{proj_adapter_stack_pallas.1} parent=5 // pred_fallthru
        _
      %p1181 = scmp.le.s32.totalorder 2, %s16
      // Predicated region
      $region45: #{proj_adapter_stack_pallas.1} parent=5 // pred_check
        %p1182 = pneg %p1181
      $region46: #{proj_adapter_stack_pallas.1} parent=5 // pred_check_branch
        %1184 = sbr.rel (%p1182) target = $region48
      $region47: #{proj_adapter_stack_pallas.1} parent=5 // pred_region
        %s1185 = ssub.s32 %s16, 2
        // Predicated region
        $region49: #{proj_adapter_stack_pallas.1} parent=47 // pred_check
          %p1186 = pneg %p183
        $region50: #{proj_adapter_stack_pallas.1} parent=47 // pred_check_branch
          %1188 = sbr.rel (%p1186) target = $region52
        $region51: #{proj_adapter_stack_pallas.1} parent=47 // pred_region
          %s1189 = sand.u32 %s168, 1
          %s1190 = scalar_lea.sflag [#allocation5], %s1189
          %s1191 = sand.u32 %s168, 1
          %s1192 = smul.addr %s1191, 24
          %s1193 = scalar_lea.vmem [#allocation4], %s1192
          %1194 = dma.done %s1190, 384
        $region52: #{proj_adapter_stack_pallas.1} parent=47 // pred_fallthru
          _
      $region48: #{proj_adapter_stack_pallas.1} parent=5 // pred_fallthru
        _
    $region6: #{proj_adapter_stack_pallas.1} parent=1 // loop_footer
      %s20 = sadd.s32 1, %s16
    $region7: #{proj_adapter_stack_pallas.1} parent=1 // loop_footer_branch
      %15 = sbr.rel target = $region3
    $region8: #{proj_adapter_stack_pallas.1} parent=1 // loop_exit
      _
    %1195 = vsyncpa [#allocation5], 1
    %s1196 = scalar_lea.sflag [#allocation5], 1
    %1197 = vsyncpa %s1196, 1

</llo_original>
